<compile_context>
chip_gen: v6e
topology: v6e:2x2x1
jax: 0.10.0
libtpu: 0.0.40
codegen_flags: <defaults>
</compile_context>

<pallas_src>
import jax
import jax.numpy as jnp
from jax.experimental import pallas as pl
from jax.experimental.pallas import tpu as pltpu

_LANES = 128
_CLAMP = 10.0
_TILE_BYTES_TARGET = 4 << 20        # ~4 MiB per block
_SMALL_FALLBACK_BYTES = 256 * 1024  # below this, plain XLA fusion is faster
_VMEM_RAISE_BYTES = 40 << 20        # raised scoped-VMEM limit for large tiles


def _round_up(a, b):
    return ((a + b - 1) // b) * b


def _sublane_multiple(itemsize):
    # Minimum second-minor tile: f32 -> 8, bf16/f16 -> 16, int8/fp8 -> 32.
    return max(8, 32 // max(1, itemsize))


def _exciter_kernel(x_ref, w_ref, b_ref, o_ref):
    # x_ref: (tile_r, lanes) in the input dtype; w_ref/b_ref: (1, lanes) in the
    # compute dtype.  The (1,L)->(tile_r,L) broadcast stays implicit inside the
    # fused multiply-add-clip (no materialized broadcast temp).
    x = x_ref[...].astype(o_ref.dtype)
    o_ref[...] = jnp.clip(x * w_ref[...] + b_ref[...], -_CLAMP, _CLAMP)


def exciter_forward(x, weight, bias, *, small_fallback_bytes=_SMALL_FALLBACK_BYTES):
    """y = clamp(x * weight + bias, -10, 10); weight/bias broadcast over last axis."""
    n = x.shape[-1]
    assert weight.shape == (n,) and bias.shape == (n,)

    # PyTorch type promotion: x * (f32 parameter) computes / returns in the
    # promoted dtype (f32 for bf16/f16 inputs).
    out_dtype = jnp.promote_types(x.dtype, jnp.promote_types(weight.dtype, bias.dtype))
    w = weight.astype(out_dtype)
    b = bias.astype(out_dtype)

    in_item = jnp.dtype(x.dtype).itemsize
    out_item = jnp.dtype(out_dtype).itemsize

    # Tiny activations: fixed pallas_call / grid-step overhead dominates.
    if x.size * max(in_item, out_item) < small_fallback_bytes:
        return jnp.clip(x.astype(out_dtype) * w + b, -_CLAMP, _CLAMP)

    orig_shape = x.shape
    total = x.size

    # ---- Pack to a lane-dense (rows, lanes) view -----------------------------
    trailing = None  # number of valid flat elements if a tail pad was needed
    if _LANES % n == 0:
        # Pack 128//n logical records per 128-lane row.  Every packed row starts
        # on a multiple of n, so one pre-tiled (1, 128) weight row is exact.
        lanes = _LANES
        w_row = jnp.tile(w, lanes // n)[None, :]
        b_row = jnp.tile(b, lanes // n)[None, :]
        flat = x.reshape(-1)
        rem = total % lanes
        if rem:
            flat = jnp.pad(flat, (0, lanes - rem))  # minimal (< 128 elem) pad
            trailing = total
        x2d = flat.reshape(-1, lanes)

        def unpack(o):
            o = o.reshape(-1)
            if trailing is not None:
                o = o[:trailing]
            return o.reshape(orig_shape)
    elif n % _LANES == 0:
        # Last axis already a lane multiple: keep it on lanes (dense stores).
        lanes = n
        w_row, b_row = w[None, :], b[None, :]
        x2d = x.reshape(-1, n)

        def unpack(o):
            return o.reshape(orig_shape)
    else:
        # General n: pad last axis up to a lane multiple so stores stay unmasked.
        lanes = _round_up(n, _LANES)
        pad_n = lanes - n
        w_row = jnp.pad(w, (0, pad_n))[None, :]
        b_row = jnp.pad(b, (0, pad_n))[None, :]
        x2d = jnp.pad(x.reshape(-1, n), ((0, 0), (0, pad_n)))

        def unpack(o):
            return o[:, :n].reshape(orig_shape)

    rows = x2d.shape[0]

    # ---- Row tiling -----------------------------------------------------------
    sublane = max(_sublane_multiple(in_item), _sublane_multiple(out_item))
    per_row_bytes = lanes * max(in_item, out_item)
    tile_cap = max(sublane, (_TILE_BYTES_TARGET // per_row_bytes) // sublane * sublane)
    if rows <= sublane:
        tile_r = rows  # full-extent block along rows (always legal)
    else:
        # Keep >= 2 grid steps so v7x can shard rows across its 2 TensorCores.
        half_rows = _round_up(-(-rows // 2), sublane)
        tile_r = max(sublane, min(tile_cap, half_rows))
    grid = (pl.cdiv(rows, tile_r),)  # ragged final block is masked by Pallas

    # ---- Compiler params ------------------------------------------------------
    footprint = 2 * tile_r * lanes * (in_item + out_item)  # double-buffered in+out
    cp_kwargs = dict(dimension_semantics=("parallel",))
    if footprint > (12 << 20):
        cp_kwargs["vmem_limit_bytes"] = _VMEM_RAISE_BYTES

    out2d = pl.pallas_call(
        _exciter_kernel,
        out_shape=jax.ShapeDtypeStruct((rows, lanes), out_dtype),
        grid=grid,
        in_specs=[
            pl.BlockSpec((tile_r, lanes), lambda i: (i, 0)),
            pl.BlockSpec((1, lanes), lambda i: (0, 0)),  # weight stays resident
            pl.BlockSpec((1, lanes), lambda i: (0, 0)),  # bias stays resident
        ],
        out_specs=pl.BlockSpec((tile_r, lanes), lambda i: (i, 0)),
        compiler_params=pltpu.CompilerParams(**cp_kwargs),
    )(x2d, w_row, b_row)

    return unpack(out2d)


if __name__ == "__main__":
    key = jax.random.PRNGKey(0)
    kx, kw, kb, kx2, kx3, kx4, kw4, kb4 = jax.random.split(key, 8)

    # --- Primary example at module-scale shapes: batch=2, seq=8, n_neurons=32.
    B, S, N = 2, 8, 32
    weight = jnp.ones((N,), jnp.float32) + 0.1 * jax.random.normal(kw, (N,), jnp.float32)
    bias = jnp.zeros((N,), jnp.float32) + 0.01 * jax.random.normal(kb, (N,), jnp.float32)
    x = 8.0 * jax.random.normal(kx, (B, S, N), jnp.float32)

    out = exciter_forward(x, weight, bias, small_fallback_bytes=0)  # force Pallas path
    out = jax.block_until_ready(out)
    ref = jnp.clip(x * weight + bias, -_CLAMP, _CLAMP)
    assert out.shape == x.shape
    assert jnp.allclose(out, ref, atol=1e-6), "mismatch vs reference (small f32)"

    # --- Larger ragged case: rows (999) not a multiple of sublane or tile size;
    #     exercises the masked final block with no pad / no trailing slice.
    x2 = 8.0 * jax.random.normal(kx2, (4, 999, N), jnp.float32)
    out2 = jax.block_until_ready(exciter_forward(x2, weight, bias))
    ref2 = jnp.clip(x2 * weight + bias, -_CLAMP, _CLAMP)
    assert jnp.allclose(out2, ref2, atol=1e-6), "mismatch vs reference (ragged f32)"

    # --- bf16 input: promoted to f32 compute/output (matches PyTorch promotion),
    #     sublane rounding switches to 16.
    x3 = (8.0 * jax.random.normal(kx3, (4, 256, N), jnp.float32)).astype(jnp.bfloat16)
    out3 = jax.block_until_ready(exciter_forward(x3, weight, bias, small_fallback_bytes=0))
    ref3 = jnp.clip(x3.astype(jnp.float32) * weight + bias, -_CLAMP, _CLAMP)
    assert out3.dtype == jnp.float32
    assert jnp.allclose(out3, ref3, atol=1e-6), "mismatch vs reference (bf16 in)"

    # --- General n_neurons (128 % 24 != 0): lane-dense pad-to-128 fallback.
    N4 = 24
    w4 = jnp.ones((N4,), jnp.float32) + 0.1 * jax.random.normal(kw4, (N4,), jnp.float32)
    b4 = jnp.zeros((N4,), jnp.float32) + 0.01 * jax.random.normal(kb4, (N4,), jnp.float32)
    x4 = 8.0 * jax.random.normal(kx4, (2, 64, N4), jnp.float32)
    out4 = jax.block_until_ready(exciter_forward(x4, w4, b4, small_fallback_bytes=0))
    ref4 = jnp.clip(x4 * w4 + b4, -_CLAMP, _CLAMP)
    assert jnp.allclose(out4, ref4, atol=1e-6), "mismatch vs reference (N=24 fallback)"

    # TODO(synk): ExciterFunction.backward gradient masking and custom_backward's
    # in-place weight/bias update are training-time side effects with no
    # forward-pass Pallas equivalent.
    print("KERNEL_OK")
</pallas_src>

<mosaic_0001>
module attributes {stable_mosaic.version = 11 : i64} {
  func.func @_exciter_kernel(%arg0: i32, %arg1: memref<4x128xf32, #tpu.memory_space<vmem>>, %arg2: memref<1x128xf32, #tpu.memory_space<vmem>>, %arg3: memref<1x128xf32, #tpu.memory_space<vmem>>, %arg4: memref<4x128xf32, #tpu.memory_space<vmem>>) attributes {dimension_semantics = [#tpu.dimension_semantics<parallel>], iteration_bounds = array<i64: 1>, scalar_prefetch = 0 : i64, scratch_operands = 0 : i64, tpu.core_type = #tpu.core_type<tc>, window_params = [{transform_indices = @transform_0, window_bounds = array<i64: 4, 128>}, {pipeline_mode = #tpu.pipeline_mode<synchronous>, transform_indices = @transform_1, window_bounds = array<i64: 1, 128>}, {pipeline_mode = #tpu.pipeline_mode<synchronous>, transform_indices = @transform_2, window_bounds = array<i64: 1, 128>}, {transform_indices = @transform_3, window_bounds = array<i64: 4, 128>}]} {
    %c0 = arith.constant 0 : index
    %c0_0 = arith.constant 0 : index
    %0 = vector.load %arg1[%c0, %c0_0] : memref<4x128xf32, #tpu.memory_space<vmem>>, vector<4x128xf32>
    %c0_1 = arith.constant 0 : index
    %c0_2 = arith.constant 0 : index
    %1 = vector.load %arg2[%c0_1, %c0_2] : memref<1x128xf32, #tpu.memory_space<vmem>>, vector<1x128xf32>
    %2 = vector.broadcast %1 : vector<1x128xf32> to vector<4x128xf32>
    %3 = arith.mulf %0, %2 : vector<4x128xf32>
    %c0_3 = arith.constant 0 : index
    %c0_4 = arith.constant 0 : index
    %4 = vector.load %arg3[%c0_3, %c0_4] : memref<1x128xf32, #tpu.memory_space<vmem>>, vector<1x128xf32>
    %5 = vector.broadcast %4 : vector<1x128xf32> to vector<4x128xf32>
    %6 = arith.addf %3, %5 : vector<4x128xf32>
    %cst = arith.constant -1.000000e+01 : f32
    %cst_5 = arith.constant 1.000000e+01 : f32
    %7 = vector.broadcast %cst : f32 to vector<4x128xf32>
    %8 = arith.maximumf %7, %6 : vector<4x128xf32>
    %9 = vector.broadcast %cst_5 : f32 to vector<4x128xf32>
    %10 = arith.minimumf %9, %8 : vector<4x128xf32>
    %c0_6 = arith.constant 0 : index
    %c0_7 = arith.constant 0 : index
    %11 = vector.load %arg4[%c0_6, %c0_7] : memref<4x128xf32, #tpu.memory_space<vmem>>, vector<4x128xf32>
    tpu.vector_store %arg4[%c0_6, %c0_7], %10 {strides = array<i32>} : memref<4x128xf32, #tpu.memory_space<vmem>>, vector<4x128xf32>,
    return
  }
  func.func @transform_0(%arg0: i32) -> (i32, i32) {
    %c0_i32 = arith.constant 0 : i32
    %c0_i32_0 = arith.constant 0 : i32
    return %arg0, %c0_i32 : i32, i32
  }
  func.func @transform_1(%arg0: i32) -> (i32, i32) {
    %c0_i32 = arith.constant 0 : i32
    %c0_i32_0 = arith.constant 0 : i32
    %c0_i32_1 = arith.constant 0 : i32
    return %c0_i32, %c0_i32_0 : i32, i32
  }
  func.func @transform_2(%arg0: i32) -> (i32, i32) {
    %c0_i32 = arith.constant 0 : i32
    %c0_i32_0 = arith.constant 0 : i32
    %c0_i32_1 = arith.constant 0 : i32
    return %c0_i32, %c0_i32_0 : i32, i32
  }
  func.func @transform_3(%arg0: i32) -> (i32, i32) {
    %c0_i32 = arith.constant 0 : i32
    %c0_i32_0 = arith.constant 0 : i32
    return %arg0, %c0_i32 : i32, i32
  }
}

</mosaic_0001>

<llo_original>
// kernel: tpu_custom_call.1
$region0: #{tpu_custom_call.1}
  #allocation0 [shape = 'u32[]', space=smem, size = 0x4, offset = 0x4, fixed_abs, tag = 'smem constant byte address 0x4 - core index']
  #allocation1 [shape = 'u32[144,128]{1,0:T(1,128)}', space=vmem, size = 0x12000, scoped, tag = 'internal scratch']
  %s0 = inlined_call_operand.hbm [shape: f32[4,128], index: 0, kind: input, shape index: {}]
  %s1 = inlined_call_operand.vmem [shape: f32[1,128], index: 1, kind: input, shape index: {}]
  %s2 = inlined_call_operand.vmem [shape: f32[1,128], index: 2, kind: input, shape index: {}]
  %s3 = inlined_call_operand.hbm [shape: f32[4,128], index: 3, kind: output, shape index: {}]
  %s4 = sld [smem:[#allocation0]]
  $region26: #{tpu_custom_call.1} parent=0
    _
  %s6 = ssub.s32 1, %s4
  %s7 = scalar_select 0, %s6, %s4
  $region1: #{tpu_custom_call.1} parent=0
    #allocation2 [shape = 'u8[2048]{0}', space=vmem, size = 0x800, scoped, tag = 'input window, operand 0, single buffered']
    #allocation3 [shape = 's32[1]{0}', space=sflag, size = 0x4, scoped, tag = 'scoped memory for tpu_custom_call.1']
    #allocation4 [shape = 's32[1]{0}', space=sflag, size = 0x4, scoped, tag = 'scoped memory for tpu_custom_call.1']
    #allocation5 [shape = 'u8[2048]{0}', space=vmem, size = 0x800, scoped, tag = 'output window, operand 0, single buffered']
    %8 = vsyncpa [#allocation3], 0
    %9 = vsyncpa [#allocation4], 0
    // Predicated region
    $region2: #{tpu_custom_call.1} parent=1 // pred_check
      _
    $region3: #{tpu_custom_call.1} parent=1 // pred_check_branch
      %11 = sbr.rel (0) target = $region5
    $region4: #{tpu_custom_call.1} parent=1 // pred_region
      %s13 = ssub.s32 64, 64
      %14 = vsyncadd [#allocation3], %s13
      %s16 = sshll.u32 [#allocation2], 4
      %s17 = int_to_ptr.vmem [resolvable:$true] %s16
      %19 = dma.hbm_to_vmem [thread:$0]  %s0, 64, %s17, [#allocation3]
    $region5: #{tpu_custom_call.1} parent=1 // pred_fallthru
      _
    // Predicated region
    $region6: #{tpu_custom_call.1} parent=1 // pred_check
      _
    $region7: #{tpu_custom_call.1} parent=1 // pred_check_branch
      %21 = sbr.rel (0) target = $region9
    $region8: #{tpu_custom_call.1} parent=1 // pred_region
      _
    $region9: #{tpu_custom_call.1} parent=1 // pred_fallthru
      _
    // Predicated region
    $region10: #{tpu_custom_call.1} parent=1 // pred_check
      _
    $region11: #{tpu_custom_call.1} parent=1 // pred_check_branch
      %23 = sbr.rel (0) target = $region13
    $region12: #{tpu_custom_call.1} parent=1 // pred_region
      _
    $region13: #{tpu_custom_call.1} parent=1 // pred_fallthru
      _
    // Predicated region
    $region14: #{tpu_custom_call.1} parent=1 // pred_check
      _
    $region15: #{tpu_custom_call.1} parent=1 // pred_check_branch
      %25 = sbr.rel (0) target = $region17
    $region16: #{tpu_custom_call.1} parent=1 // pred_region
      %26 = dma.done [#allocation3], 64
    $region17: #{tpu_custom_call.1} parent=1 // pred_fallthru
      _
    %v27 = vld [vmem:[#allocation2] sm:$0xf]
    %v28 = vld [vmem:[%s1] sm:$0x1]
    %v30 = vlaneseq
    %v31 = vshrl.u32 %v30, 7
    %v32 = vsub.s32 0, %v31
    %v33 = vrot.slane %v28, %v32
    %v35 = vmul.f32 %v27, %v33
    %v36 = vld [vmem:[%s2] sm:$0x1]
    %v38 = vlaneseq
    %v39 = vshrl.u32 %v38, 7
    %v40 = vsub.s32 0, %v39
    %v41 = vrot.slane %v36, %v40
    %v43 = vadd.f32 %v35, %v41
    %v44 = vmax.f32 %v43, -10.0
    %v45 = vmin.f32 %v44, 10.0
    %46 = vst [vmem:[#allocation5] sm:$0xf] %v45
    // Predicated region
    $region18: #{tpu_custom_call.1} parent=1 // pred_check
      _
    $region19: #{tpu_custom_call.1} parent=1 // pred_check_branch
      %48 = sbr.rel (0) target = $region21
    $region20: #{tpu_custom_call.1} parent=1 // pred_region
      %s50 = ssub.s32 64, 64
      %51 = vsyncadd [#allocation4], %s50
      %s53 = sshll.u32 [#allocation5], 4
      %s54 = int_to_ptr.vmem [resolvable:$true] %s53
      %56 = dma.vmem_to_hbm [thread:$0]  %s54, 64, %s3, [#allocation4]
    $region21: #{tpu_custom_call.1} parent=1 // pred_fallthru
      _
    // Predicated region
    $region22: #{tpu_custom_call.1} parent=1 // pred_check
      _
    $region23: #{tpu_custom_call.1} parent=1 // pred_check_branch
      %58 = sbr.rel (0) target = $region25
    $region24: #{tpu_custom_call.1} parent=1 // pred_region
      %59 = dma.done [#allocation4], 64
    $region25: #{tpu_custom_call.1} parent=1 // pred_fallthru
      _
    %60 = vsyncpa [#allocation3], 1
    %61 = vsyncpa [#allocation4], 1

</llo_original>
